<compile_context>
chip_gen: v7x
topology: tpu7x:2x2x1
jax: 0.10.0
libtpu: 0.0.40
codegen_flags: <defaults>
</compile_context>

<pallas_src>
import jax
import jax.numpy as jnp
from jax.experimental import pallas as pl
from jax.experimental.pallas import tpu as pltpu


# ---------------------------------------------------------------------------
# Packed-weight slab layout (rows x 128 lanes, f32).  Row starts are 8-aligned.
#   rows   0:9,   cols 0:8    : vstack(wrel1, wroot1, b1)          (2*r0+1, r1)
#   rows  16:33,  cols 0:16   : vstack(wrel2, wroot2, b2)          (2*r1+1, r2)
#   rows  40:57,  cols 0:16   : vstack([wrel3 | wroot3], [0 | b3]) (r2+1, 2*r3)
#   rows  64:73,  cols 0:32   : vstack(wfc1, bfc1)                 (r3+1, n1)
#   rows  80:113, cols 0:128  : vstack(wfc2, bfc2) zero-padded     (n1+1, 128)
# ---------------------------------------------------------------------------
_W_ROWS = 120
_W_COLS = 128


def naive_gcn_kernel(a_ref, x_ref, w_ref, out_ref):
    a = a_ref[...]                      # (N, N) bf16 row-normalized adjacency
    h = x_ref[...]                      # (N, r0) f32
    n = h.shape[0]
    ones = jnp.ones((n, 1), jnp.float32)   # hoisted; reused for every bias fold

    # Static views into the packed weight slab (zero-cost slicing of VMEM ref).
    w1 = w_ref[0:9, 0:8]        # (9, 8)
    w2 = w_ref[16:33, 0:16]     # (17, 16)
    w3 = w_ref[40:57, 0:16]     # (17, 16)
    wfc1 = w_ref[64:73, 0:32]   # (9, 32)
    wfc2 = w_ref[80:113, 0:128] # (33, 128), only lane 0 is non-zero

    def aggregate(v):
        # mean aggregation: bf16 MXU matmul with f32 accumulation
        return jnp.dot(a, v.astype(jnp.bfloat16),
                       preferred_element_type=jnp.float32)

    def graph_conv_agg_first(h, w):
        # layers 1/2 (r_out >= r_in): agg = A @ h, then one fused matmul
        #   [agg | h | 1] @ vstack(Wrel, Wroot, b)
        agg = aggregate(h)
        z = jnp.concatenate([agg, h, ones], axis=-1)
        return jnp.dot(z, w, preferred_element_type=jnp.float32)

    h = jax.nn.sigmoid(graph_conv_agg_first(h, w1))
    h = jax.nn.sigmoid(graph_conv_agg_first(h, w2))

    # layer 3 (r_in 16 > r_out 8): contract weights first, then aggregate.
    #   z = [h | 1] @ [[wrel3 | wroot3], [0 | b3]]  ->  [h@Wrel3 | h@Wroot3+b3]
    z = jnp.dot(jnp.concatenate([h, ones], axis=-1), w3,
                preferred_element_type=jnp.float32)          # (N, 16)
    h = jax.nn.sigmoid(aggregate(z[:, 0:8]) + z[:, 8:16])

    # fc1 + sigmoid (bias folded into the matmul)
    h = jax.nn.sigmoid(
        jnp.dot(jnp.concatenate([h, ones], axis=-1), wfc1,
                preferred_element_type=jnp.float32))

    # fc2 (bias folded; lane-padded to 128 cols -> unmasked lane-dense store).
    out_ref[...] = jnp.dot(jnp.concatenate([h, ones], axis=-1), wfc2,
                           preferred_element_type=jnp.float32)


def build_mean_adjacency(edge_index, num_nodes):
    """Dense row-normalized adjacency: A[i, j] = 1/indeg(i) for edge j -> i."""
    src, dst = edge_index[0], edge_index[1]
    a = jnp.zeros((num_nodes, num_nodes), jnp.float32).at[dst, src].add(1.0)
    deg = a.sum(axis=1, keepdims=True)
    return a / jnp.maximum(deg, 1.0)


def pack_params(params):
    """Pack all weights/biases (bias rows folded under a ones column) into one slab."""
    w1 = jnp.concatenate([params["wrel1"], params["wroot1"], params["b1"]], 0)   # (9, 8)
    w2 = jnp.concatenate([params["wrel2"], params["wroot2"], params["b2"]], 0)   # (17, 16)
    w3 = jnp.concatenate(
        [jnp.concatenate([params["wrel3"], params["wroot3"]], 1),                # (16, 16)
         jnp.concatenate([jnp.zeros((1, 8), jnp.float32), params["b3"]], 1)],    # (1, 16)
        0)                                                                       # (17, 16)
    wfc1 = jnp.concatenate([params["wfc1"], params["bfc1"]], 0)                  # (9, 32)
    wfc2 = jnp.concatenate([params["wfc2"], params["bfc2"]], 0)                  # (33, 1)

    w = jnp.zeros((_W_ROWS, _W_COLS), jnp.float32)
    w = w.at[0:9, 0:8].set(w1)
    w = w.at[16:33, 0:16].set(w2)
    w = w.at[40:57, 0:16].set(w3)
    w = w.at[64:73, 0:32].set(wfc1)
    w = w.at[80:113, 0:1].set(wfc2)   # lanes 1..127 stay zero -> padded output cols = 0
    return w


def naive_gcn_forward(x, edge_index, params):
    n = x.shape[0]
    # Glue: graph -> dense mean-aggregation operator (bf16 for the MXU).
    a_mean = build_mean_adjacency(edge_index, n).astype(jnp.bfloat16)
    w_pack = pack_params(params)

    out_padded = pl.pallas_call(
        naive_gcn_kernel,
        out_shape=jax.ShapeDtypeStruct((n, _W_COLS), jnp.float32),
        in_specs=[pl.BlockSpec(memory_space=pltpu.MemorySpace.VMEM)] * 3,
        out_specs=pl.BlockSpec(memory_space=pltpu.MemorySpace.VMEM),
    )(a_mean, x, w_pack)
    return out_padded[:, :1]   # real fc2 output lives in lane 0


def naive_gcn_reference(x, edge_index, params):
    """Pure-JAX reference (f32 everywhere) mirroring the PyTorch forward."""
    n = x.shape[0]
    a = build_mean_adjacency(edge_index, n)

    def gconv(h, wrel, wroot, b):
        return (a @ h) @ wrel + b + h @ wroot

    h = jax.nn.sigmoid(gconv(x, params["wrel1"], params["wroot1"], params["b1"]))
    h = jax.nn.sigmoid(gconv(h, params["wrel2"], params["wroot2"], params["b2"]))
    h = jax.nn.sigmoid(gconv(h, params["wrel3"], params["wroot3"], params["b3"]))
    h = jax.nn.sigmoid(h @ params["wfc1"] + params["bfc1"])
    return h @ params["wfc2"] + params["bfc2"]


def init_params(key, r0=4, gcn_sizes=(8, 16, 8), n1=32):
    r1, r2, r3 = gcn_sizes
    ks = jax.random.split(key, 12)

    def w(k, shape):
        return (0.1 * jax.random.normal(k, shape)).astype(jnp.float32)

    return {
        # GraphConv layer i: lin_root (in,out) no bias; lin_rel (in,out) + bias
        "wroot1": w(ks[0], (r0, r1)), "wrel1": w(ks[1], (r0, r1)), "b1": w(ks[2], (1, r1)),
        "wroot2": w(ks[3], (r1, r2)), "wrel2": w(ks[4], (r1, r2)), "b2": w(ks[5], (1, r2)),
        "wroot3": w(ks[6], (r2, r3)), "wrel3": w(ks[7], (r2, r3)), "b3": w(ks[8], (1, r3)),
        "wfc1": w(ks[9], (r3, n1)), "bfc1": w(ks[10], (1, n1)),
        "wfc2": w(ks[11], (n1, 1)), "bfc2": jnp.zeros((1, 1), jnp.float32),
    }


if __name__ == "__main__":
    key = jax.random.PRNGKey(0)
    k_x, k_p = jax.random.split(key)

    num_nodes = 16
    node_feature_size = 4

    x = jax.random.normal(k_x, (num_nodes, node_feature_size), dtype=jnp.float32)

    # Deterministic small graph: directed ring both ways (E = 2 * N edges).
    fwd_src = jnp.arange(num_nodes, dtype=jnp.int32)
    fwd_dst = (fwd_src + 1) % num_nodes
    edge_index = jnp.stack(
        [jnp.concatenate([fwd_src, fwd_dst]), jnp.concatenate([fwd_dst, fwd_src])],
        axis=0,
    )  # (2, 32)

    params = init_params(k_p, r0=node_feature_size)

    out = naive_gcn_forward(x, edge_index, params)
    jax.block_until_ready(out)
    assert out.shape == (num_nodes, 1)

    # Correctness check vs. pure-JAX f32 reference (bf16 aggregation -> loose tol).
    ref = naive_gcn_reference(x, edge_index, params)
    assert jnp.allclose(out, ref, atol=5e-2, rtol=5e-2), (
        f"max abs err {jnp.max(jnp.abs(out - ref))}")

    print("KERNEL_OK")
</pallas_src>

<mosaic_0001>
module attributes {stable_mosaic.version = 11 : i64} {
  func.func @naive_gcn_kernel(%arg0: memref<16x16xbf16, #tpu.memory_space<vmem>>, %arg1: memref<16x4xf32, #tpu.memory_space<vmem>>, %arg2: memref<120x128xf32, #tpu.memory_space<vmem>>, %arg3: memref<16x128xf32, #tpu.memory_space<vmem>>) attributes {dimension_semantics = [], scalar_prefetch = 0 : i64, scratch_operands = 0 : i64, tpu.core_type = #tpu.core_type<tc>} {
    %c0 = arith.constant 0 : index
    %c0_0 = arith.constant 0 : index
    %0 = vector.load %arg0[%c0, %c0_0] : memref<16x16xbf16, #tpu.memory_space<vmem>>, vector<16x16xbf16>
    %c0_1 = arith.constant 0 : index
    %c0_2 = arith.constant 0 : index
    %1 = vector.load %arg1[%c0_1, %c0_2] : memref<16x4xf32, #tpu.memory_space<vmem>>, vector<16x4xf32>
    %cst = arith.constant 1.000000e+00 : f32
    %2 = vector.broadcast %cst : f32 to vector<16x1xf32>
    %c0_3 = arith.constant 0 : index
    %c0_4 = arith.constant 0 : index
    %3 = vector.load %arg2[%c0_3, %c0_4] : memref<120x128xf32, #tpu.memory_space<vmem>>, vector<9x8xf32>
    %c16 = arith.constant 16 : index
    %c0_5 = arith.constant 0 : index
    %4 = vector.load %arg2[%c16, %c0_5] : memref<120x128xf32, #tpu.memory_space<vmem>>, vector<17x16xf32>
    %c40 = arith.constant 40 : index
    %c0_6 = arith.constant 0 : index
    %5 = vector.load %arg2[%c40, %c0_6] : memref<120x128xf32, #tpu.memory_space<vmem>>, vector<17x16xf32>
    %c64 = arith.constant 64 : index
    %c0_7 = arith.constant 0 : index
    %6 = vector.load %arg2[%c64, %c0_7] : memref<120x128xf32, #tpu.memory_space<vmem>>, vector<9x32xf32>
    %c80 = arith.constant 80 : index
    %c0_8 = arith.constant 0 : index
    %7 = vector.load %arg2[%c80, %c0_8] : memref<120x128xf32, #tpu.memory_space<vmem>>, vector<33x128xf32>
    %8 = arith.truncf %1 : vector<16x4xf32> to vector<16x4xbf16>
    %cst_9 = arith.constant dense<0.000000e+00> : vector<16x4xf32>
    %9 = tpu.matmul %0, %8, %cst_9 {dimension_numbers = #tpu.dot_dimension_numbers<[1], [0], [0], [1], [0, 0, 1, 1], [], []>} : vector<16x16xbf16>, vector<16x4xbf16>, vector<16x4xf32> -> vector<16x4xf32>
    %10 = tpu.concatenate %9, %1, %2 in 1 : vector<16x4xf32>, vector<16x4xf32>, vector<16x1xf32> -> vector<16x9xf32>
    %cst_10 = arith.constant dense<0.000000e+00> : vector<16x8xf32>
    %11 = tpu.matmul %10, %3, %cst_10 {dimension_numbers = #tpu.dot_dimension_numbers<[1], [0], [0], [1], [0, 0, 1, 1], [], []>} : vector<16x9xf32>, vector<9x8xf32>, vector<16x8xf32> -> vector<16x8xf32>
    %12 = arith.negf %11 : vector<16x8xf32>
    %13 = math.exp %12 : vector<16x8xf32>
    %cst_11 = arith.constant 1.000000e+00 : f32
    %14 = vector.broadcast %cst_11 : f32 to vector<16x8xf32>
    %15 = arith.addf %14, %13 : vector<16x8xf32>
    %16 = arith.divf %14, %15 : vector<16x8xf32>
    %17 = arith.truncf %16 : vector<16x8xf32> to vector<16x8xbf16>
    %cst_12 = arith.constant dense<0.000000e+00> : vector<16x8xf32>
    %18 = tpu.matmul %0, %17, %cst_12 {dimension_numbers = #tpu.dot_dimension_numbers<[1], [0], [0], [1], [0, 0, 1, 1], [], []>} : vector<16x16xbf16>, vector<16x8xbf16>, vector<16x8xf32> -> vector<16x8xf32>
    %19 = tpu.concatenate %18, %16, %2 in 1 : vector<16x8xf32>, vector<16x8xf32>, vector<16x1xf32> -> vector<16x17xf32>
    %cst_13 = arith.constant dense<0.000000e+00> : vector<16x16xf32>
    %20 = tpu.matmul %19, %4, %cst_13 {dimension_numbers = #tpu.dot_dimension_numbers<[1], [0], [0], [1], [0, 0, 1, 1], [], []>} : vector<16x17xf32>, vector<17x16xf32>, vector<16x16xf32> -> vector<16x16xf32>
    %21 = arith.negf %20 : vector<16x16xf32>
    %22 = math.exp %21 : vector<16x16xf32>
    %cst_14 = arith.constant 1.000000e+00 : f32
    %23 = vector.broadcast %cst_14 : f32 to vector<16x16xf32>
    %24 = arith.addf %23, %22 : vector<16x16xf32>
    %25 = arith.divf %23, %24 : vector<16x16xf32>
    %26 = tpu.concatenate %25, %2 in 1 : vector<16x16xf32>, vector<16x1xf32> -> vector<16x17xf32>
    %cst_15 = arith.constant dense<0.000000e+00> : vector<16x16xf32>
    %27 = tpu.matmul %26, %5, %cst_15 {dimension_numbers = #tpu.dot_dimension_numbers<[1], [0], [0], [1], [0, 0, 1, 1], [], []>} : vector<16x17xf32>, vector<17x16xf32>, vector<16x16xf32> -> vector<16x16xf32>
    %28 = vector.extract_strided_slice %27 {offsets = [0, 0], sizes = [16, 8], strides = [1, 1]} : vector<16x16xf32> to vector<16x8xf32>
    %29 = arith.truncf %28 : vector<16x8xf32> to vector<16x8xbf16>
    %cst_16 = arith.constant dense<0.000000e+00> : vector<16x8xf32>
    %30 = tpu.matmul %0, %29, %cst_16 {dimension_numbers = #tpu.dot_dimension_numbers<[1], [0], [0], [1], [0, 0, 1, 1], [], []>} : vector<16x16xbf16>, vector<16x8xbf16>, vector<16x8xf32> -> vector<16x8xf32>
    %31 = vector.extract_strided_slice %27 {offsets = [0, 8], sizes = [16, 8], strides = [1, 1]} : vector<16x16xf32> to vector<16x8xf32>
    %32 = arith.addf %30, %31 : vector<16x8xf32>
    %33 = arith.negf %32 : vector<16x8xf32>
    %34 = math.exp %33 : vector<16x8xf32>
    %cst_17 = arith.constant 1.000000e+00 : f32
    %35 = vector.broadcast %cst_17 : f32 to vector<16x8xf32>
    %36 = arith.addf %35, %34 : vector<16x8xf32>
    %37 = arith.divf %35, %36 : vector<16x8xf32>
    %38 = tpu.concatenate %37, %2 in 1 : vector<16x8xf32>, vector<16x1xf32> -> vector<16x9xf32>
    %cst_18 = arith.constant dense<0.000000e+00> : vector<16x32xf32>
    %39 = tpu.matmul %38, %6, %cst_18 {dimension_numbers = #tpu.dot_dimension_numbers<[1], [0], [0], [1], [0, 0, 1, 1], [], []>} : vector<16x9xf32>, vector<9x32xf32>, vector<16x32xf32> -> vector<16x32xf32>
    %40 = arith.negf %39 : vector<16x32xf32>
    %41 = math.exp %40 : vector<16x32xf32>
    %cst_19 = arith.constant 1.000000e+00 : f32
    %42 = vector.broadcast %cst_19 : f32 to vector<16x32xf32>
    %43 = arith.addf %42, %41 : vector<16x32xf32>
    %44 = arith.divf %42, %43 : vector<16x32xf32>
    %45 = tpu.concatenate %44, %2 in 1 : vector<16x32xf32>, vector<16x1xf32> -> vector<16x33xf32>
    %cst_20 = arith.constant dense<0.000000e+00> : vector<16x128xf32>
    %46 = tpu.matmul %45, %7, %cst_20 {dimension_numbers = #tpu.dot_dimension_numbers<[1], [0], [0], [1], [0, 0, 1, 1], [], []>} : vector<16x33xf32>, vector<33x128xf32>, vector<16x128xf32> -> vector<16x128xf32>
    %c0_21 = arith.constant 0 : index
    %c0_22 = arith.constant 0 : index
    %47 = vector.load %arg3[%c0_21, %c0_22] : memref<16x128xf32, #tpu.memory_space<vmem>>, vector<16x128xf32>
    tpu.vector_store %arg3[%c0_21, %c0_22], %46 {strides = array<i32>} : memref<16x128xf32, #tpu.memory_space<vmem>>, vector<16x128xf32>,
    return
  }
}

</mosaic_0001>

<llo_original>
// kernel: tpu_custom_call.1
$region0: #{tpu_custom_call.1}
  #allocation0 [shape = 'u32[]', space=smem, size = 0x4, offset = 0x4, fixed_abs, tag = 'smem constant byte address 0x4 - core index']
  #allocation1 [shape = 'u32[144,128]{1,0:T(1,128)}', space=vmem, size = 0x12000, scoped, tag = 'internal scratch']
  %s0 = inlined_call_operand.vmem [shape: bf16[16,16], index: 0, kind: input, shape index: {}]
  %s1 = inlined_call_operand.vmem [shape: f32[16,4], index: 1, kind: input, shape index: {}]
  %s2 = inlined_call_operand.hbm [shape: f32[120,128], index: 2, kind: input, shape index: {}]
  %s3 = inlined_call_operand.hbm [shape: f32[16,128], index: 3, kind: output, shape index: {}]
  %s4 = sld [smem:[#allocation0]]
  $region26: #{tpu_custom_call.1} parent=0
    _
  %s6 = ssub.s32 1, %s4
  %s7 = scalar_select 0, %s6, %s4
  $region1: #{tpu_custom_call.1} parent=0
    #allocation2 [shape = 'u8[61440]{0}', space=vmem, size = 0xf000, scoped, tag = 'input window, operand 2, single buffered']
    #allocation3 [shape = 's32[1]{0}', space=sflag, size = 0x4, scoped, tag = 'scoped memory for tpu_custom_call.1']
    #allocation4 [shape = 's32[1]{0}', space=sflag, size = 0x4, scoped, tag = 'scoped memory for tpu_custom_call.1']
    #allocation5 [shape = 'u8[8192]{0}', space=vmem, size = 0x2000, scoped, tag = 'output window, operand 0, single buffered']
    %8 = vsyncpa [#allocation3], 0
    %9 = vsyncpa [#allocation4], 0
    // Predicated region
    $region2: #{tpu_custom_call.1} parent=1 // pred_check
      _
    $region3: #{tpu_custom_call.1} parent=1 // pred_check_branch
      %11 = sbr.rel (0) target = $region5
    $region4: #{tpu_custom_call.1} parent=1 // pred_region
      _
    $region5: #{tpu_custom_call.1} parent=1 // pred_fallthru
      _
    // Predicated region
    $region6: #{tpu_custom_call.1} parent=1 // pred_check
      _
    $region7: #{tpu_custom_call.1} parent=1 // pred_check_branch
      %13 = sbr.rel (0) target = $region9
    $region8: #{tpu_custom_call.1} parent=1 // pred_region
      _
    $region9: #{tpu_custom_call.1} parent=1 // pred_fallthru
      _
    // Predicated region
    $region10: #{tpu_custom_call.1} parent=1 // pred_check
      _
    $region11: #{tpu_custom_call.1} parent=1 // pred_check_branch
      %15 = sbr.rel (0) target = $region13
    $region12: #{tpu_custom_call.1} parent=1 // pred_region
      %s17 = ssub.s32 1920, 1920
      %18 = vsyncadd [#allocation3], %s17
      %s19 = sshll.u32 [#allocation2], 4
      %s20 = int_to_ptr.vmem [resolvable:$true] %s19
      %25 = dma.hbm_to_vmem [thread:$0]  %s2, 1920, %s20, [#allocation3], 128, 128, 8
    $region13: #{tpu_custom_call.1} parent=1 // pred_fallthru
      _
    // Predicated region
    $region14: #{tpu_custom_call.1} parent=1 // pred_check
      _
    $region15: #{tpu_custom_call.1} parent=1 // pred_check_branch
      %27 = sbr.rel (0) target = $region17
    $region16: #{tpu_custom_call.1} parent=1 // pred_region
      %28 = dma.done [#allocation3], 1920
    $region17: #{tpu_custom_call.1} parent=1 // pred_fallthru
      _
    %v30 = vld [vmem:[%s0] sm:$0xf]
    %v31 = vld [vmem:[%s0 + $0x4] sm:$0xf]
    %v32 = vld [vmem:[%s1] sm:$0xff]
    %v33 = vld [vmem:[%s1 + $0x8] sm:$0xff]
    %v34 = vld [vmem:[#allocation2] sm:$0xff]
    %v35 = vld [vmem:[#allocation2 + $0x8] sm:$0x1]
    %v36 = vld [vmem:[#allocation2 + $0x10] sm:$0xff]
    %v37 = vld [vmem:[#allocation2 + $0x18] sm:$0xff]
    %v38 = vld [vmem:[#allocation2 + $0x20] sm:$0x1]
    %v39 = vld [vmem:[#allocation2 + $0x28] sm:$0xff]
    %v40 = vld [vmem:[#allocation2 + $0x30] sm:$0xff]
    %v41 = vld [vmem:[#allocation2 + $0x38] sm:$0x1]
    %v42 = vld [vmem:[#allocation2 + $0x40] sm:$0xff]
    %v43 = vld [vmem:[#allocation2 + $0x48] sm:$0x1]
    %v44 = vld [vmem:[#allocation2 + $0x50] sm:$0xff]
    %v45 = vld [vmem:[#allocation2 + $0x58] sm:$0xff]
    %v46 = vld [vmem:[#allocation2 + $0x60] sm:$0xff]
    %v47 = vld [vmem:[#allocation2 + $0x68] sm:$0xff]
    %v48 = vld [vmem:[#allocation2 + $0x70] sm:$0x1]
    %v49 = vpack.c.bf16 %v33, %v32
    %v52 = vunpack.c.l.b16 %v30
    %v53 = vunpack.c.l.b16 %v31
    %v54 = vpack.c.b16 %v53, %v52
    %vm55 = vcmask 130048
    %v57 = vsel %vm55, %v54, 0
    %59 = vmatprep.subr.bf16.mxu0 0
    %60 = vmatpush1.bf16.msra.mxu0 %v49
    %61 = vmatprep.subr.bf16.mxu0 0
    %62 = vmatpush1.bf16.msra.mxu0 0
    %63 = vmatprep.subr.bf16.mxu0 0
    %64 = vmatpush1.bf16.msra.mxu0 0
    %65 = vmatprep.subr.bf16.mxu0 0
    %66 = vmatpush1.bf16.msra.mxu0 0
    %67 = vmatprep.subr.bf16.mxu0 0
    %68 = vmatpush1.bf16.msra.mxu0 0
    %69 = vmatprep.subr.bf16.mxu0 0
    %70 = vmatpush1.bf16.msra.mxu0 0
    %71 = vmatprep.subr.bf16.mxu0 0
    %72 = vmatpush1.bf16.msra.mxu0 0
    %73 = vmatprep.subr.bf16.mxu0 0
    %74 = vmatpush1.bf16.msra.mxu0 0
    %75 = vmatprep.subr.bf16.mxu0 0
    %76 = vmatpush1.bf16.msra.mxu0 0
    %77 = vmatprep.subr.bf16.mxu0 0
    %78 = vmatpush1.bf16.msra.mxu0 0
    %79 = vmatprep.subr.bf16.mxu0 0
    %80 = vmatpush1.bf16.msra.mxu0 0
    %81 = vmatprep.subr.bf16.mxu0 0
    %82 = vmatpush1.bf16.msra.mxu0 0
    %83 = vmatprep.subr.bf16.mxu0 0
    %84 = vmatpush1.bf16.msra.mxu0 0
    %85 = vmatprep.subr.bf16.mxu0 0
    %86 = vmatpush1.bf16.msra.mxu0 0
    %87 = vmatprep.subr.bf16.mxu0 0
    %88 = vmatpush1.bf16.msra.mxu0 0
    %89 = vmatprep.subr.bf16.mxu0 0
    %90 = vmatpush1.bf16.msra.mxu0 0
    %91 = vmatprep.mubr.bf16.mxu0 0
    %92 = vmatmul.mubr.bf16.gmra.mrb[0].mxu0 %v57
    %v93 = vpop.f32.mrb[0].mxu0
    %v94 = vadd.f32 0.0, %v93
    %v95 = vpop.f32.mrb[0].mxu0
    %v96 = vpop.f32.mrb[0].mxu0
    %v97 = vadd.f32 0.0, %v96
    %v98 = vpop.f32.mrb[0].mxu0
    %99 = vdwg.mxu0
    %102 = vrot.lane.b32.xlu0 %v32, 4
    %v103 = vpop.permute.xlu0 %102
    %104 = vrot.lane.b32.xlu0 %v33, 4
    %v105 = vpop.permute.xlu0 %104
    %vm108 = vcmask 31744
    %v109 = vsel %vm108, %v94, %v103
    %v110 = vsel %vm108, %v97, %v105
    %vm111 = vcmask 64512
    %v112 = vsel %vm111, %v109, 1.0
    %v113 = vsel %vm111, %v110, 1.0
    %vm114 = vcmask 72704
    %v116 = vsel %vm114, %v112, 0
    %v119 = vsel %vm114, %v113, 0
    %vm121 = vcmask 1040384
    %v123 = vsel %vm121, %v35, 0
    %125 = vmatprep.subr.mxu0 0.0
    %126 = vmatpush1.msra.mxu0 %v34
    %127 = vmatprep.subr.mxu0 0.0
    %128 = vmatpush1.msra.mxu0 %v123
    %129 = vmatprep.subr.mxu0 0.0
    %130 = vmatpush1.msra.mxu0 0.0
    %131 = vmatprep.subr.mxu0 0.0
    %132 = vmatpush1.msra.mxu0 0.0
    %133 = vmatprep.subr.mxu0 0.0
    %134 = vmatpush1.msra.mxu0 0.0
    %135 = vmatprep.subr.mxu0 0.0
    %136 = vmatpush1.msra.mxu0 0.0
    %137 = vmatprep.subr.mxu0 0.0
    %138 = vmatpush1.msra.mxu0 0.0
    %139 = vmatprep.subr.mxu0 0.0
    %140 = vmatpush1.msra.mxu0 0.0
    %141 = vmatprep.subr.mxu0 0.0
    %142 = vmatpush1.msra.mxu0 0.0
    %143 = vmatprep.subr.mxu0 0.0
    %144 = vmatpush1.msra.mxu0 0.0
    %145 = vmatprep.subr.mxu0 0.0
    %146 = vmatpush1.msra.mxu0 0.0
    %147 = vmatprep.subr.mxu0 0.0
    %148 = vmatpush1.msra.mxu0 0.0
    %149 = vmatprep.subr.mxu0 0.0
    %150 = vmatpush1.msra.mxu0 0.0
    %151 = vmatprep.subr.mxu0 0.0
    %152 = vmatpush1.msra.mxu0 0.0
    %153 = vmatprep.subr.mxu0 0.0
    %154 = vmatpush1.msra.mxu0 0.0
    %155 = vmatprep.subr.mxu0 0.0
    %156 = vmatpush1.msra.mxu0 0.0
    %157 = vmatprep.subr.mxu0 0.0
    %158 = vmatpush1.msra.mxu0 0.0
    %159 = vmatprep.subr.mxu0 0.0
    %160 = vmatpush1.msra.mxu0 0.0
    %161 = vmatprep.subr.mxu0 0.0
    %162 = vmatpush1.msra.mxu0 0.0
    %163 = vmatprep.subr.mxu0 0.0
    %164 = vmatpush1.msra.mxu0 0.0
    %165 = vmatprep.subr.mxu0 0.0
    %166 = vmatpush1.msra.mxu0 0.0
    %167 = vmatprep.subr.mxu0 0.0
    %168 = vmatpush1.msra.mxu0 0.0
    %169 = vmatprep.subr.mxu0 0.0
    %170 = vmatpush1.msra.mxu0 0.0
    %171 = vmatprep.subr.mxu0 0.0
    %172 = vmatpush1.msra.mxu0 0.0
    %173 = vmatprep.subr.mxu0 0.0
    %174 = vmatpush1.msra.mxu0 0.0
    %175 = vmatprep.subr.mxu0 0.0
    %176 = vmatpush1.msra.mxu0 0.0
    %177 = vmatprep.subr.mxu0 0.0
    %178 = vmatpush1.msra.mxu0 0.0
    %179 = vmatprep.subr.mxu0 0.0
    %180 = vmatpush1.msra.mxu0 0.0
    %181 = vmatprep.subr.mxu0 0.0
    %182 = vmatpush1.msra.mxu0 0.0
    %183 = vmatprep.subr.mxu0 0.0
    %184 = vmatpush1.msra.mxu0 0.0
    %185 = vmatprep.subr.mxu0 0.0
    %186 = vmatpush1.msra.mxu0 0.0
    %187 = vmatprep.subr.mxu0 0.0
    %188 = vmatpush1.msra.mxu0 0.0
    %189 = vmatprep.mubr.f32.mxu0 0.0
    %190 = vmatmul.mubr.f32.gmra.mrb[0].mxu0 %v116
    %v191 = vpop.f32.mrb[0].mxu0
    %v192 = vadd.f32 0.0, %v191
    %v193 = vpop.f32.mrb[0].mxu0
    %194 = vmatprep.mubr.f32.mxu0 0.0
    %195 = vmatmul.mubr.f32.gmra.mrb[0].mxu0 %v119
    %v196 = vpop.f32.mrb[0].mxu0
    %v197 = vadd.f32 0.0, %v196
    %v198 = vpop.f32.mrb[0].mxu0
    %199 = vdwg.mxu0
    %v200 = vxor.u32 %v192, 2147483648
    %v201 = vxor.u32 %v197, 2147483648
    %v202 = vmul.f32 %v200, 1.442695
    %v203 = vpow.pop %v202
    %v204 = vmul.f32 %v201, 1.442695
    %v205 = vpow.pop %v204
    %v206 = vadd.f32 %v203, 1.0
    %v207 = vadd.f32 %v205, 1.0
    %v208 = vrcp.pop %v206
    %v209 = vmul.f32 1.0, %v208
    %v210 = vrcp.pop %v207
    %v211 = vmul.f32 1.0, %v210
    %v212 = vpack.c.bf16 %v211, %v209
    %213 = vmatprep.subr.bf16.mxu0 0
    %214 = vmatpush1.bf16.msra.mxu0 %v212
    %215 = vmatprep.subr.bf16.mxu0 0
    %216 = vmatpush1.bf16.msra.mxu0 0
    %217 = vmatprep.subr.bf16.mxu0 0
    %218 = vmatpush1.bf16.msra.mxu0 0
    %219 = vmatprep.subr.bf16.mxu0 0
    %220 = vmatpush1.bf16.msra.mxu0 0
    %221 = vmatprep.subr.bf16.mxu0 0
    %222 = vmatpush1.bf16.msra.mxu0 0
    %223 = vmatprep.subr.bf16.mxu0 0
    %224 = vmatpush1.bf16.msra.mxu0 0
    %225 = vmatprep.subr.bf16.mxu0 0
    %226 = vmatpush1.bf16.msra.mxu0 0
    %227 = vmatprep.subr.bf16.mxu0 0
    %228 = vmatpush1.bf16.msra.mxu0 0
    %229 = vmatprep.subr.bf16.mxu0 0
    %230 = vmatpush1.bf16.msra.mxu0 0
    %231 = vmatprep.subr.bf16.mxu0 0
    %232 = vmatpush1.bf16.msra.mxu0 0
    %233 = vmatprep.subr.bf16.mxu0 0
    %234 = vmatpush1.bf16.msra.mxu0 0
    %235 = vmatprep.subr.bf16.mxu0 0
    %236 = vmatpush1.bf16.msra.mxu0 0
    %237 = vmatprep.subr.bf16.mxu0 0
    %238 = vmatpush1.bf16.msra.mxu0 0
    %239 = vmatprep.subr.bf16.mxu0 0
    %240 = vmatpush1.bf16.msra.mxu0 0
    %241 = vmatprep.subr.bf16.mxu0 0
    %242 = vmatpush1.bf16.msra.mxu0 0
    %243 = vmatprep.subr.bf16.mxu0 0
    %244 = vmatpush1.bf16.msra.mxu0 0
    %245 = vmatprep.mubr.bf16.mxu0 0
    %246 = vmatmul.mubr.bf16.gmra.mrb[0].mxu0 %v57
    %v247 = vpop.f32.mrb[0].mxu0
    %v248 = vadd.f32 0.0, %v247
    %v249 = vpop.f32.mrb[0].mxu0
    %v250 = vpop.f32.mrb[0].mxu0
    %v251 = vadd.f32 0.0, %v250
    %v252 = vpop.f32.mrb[0].mxu0
    %253 = vdwg.mxu0
    %256 = vrot.lane.b32.xlu0 %v209, 8
    %v257 = vpop.permute.xlu0 %256
    %258 = vrot.lane.b32.xlu0 %v211, 8
    %v259 = vpop.permute.xlu0 %258
    %v262 = vsel %vm111, %v248, %v257
    %v263 = vsel %vm111, %v251, %v259
    %v264 = vsel %vm55, %v262, 1.0
    %v265 = vsel %vm55, %v263, 1.0
    %vm266 = vcmask 138240
    %v268 = vsel %vm266, %v264, 0
    %v271 = vsel %vm266, %v265, 0
    %v274 = vsel %vm121, %v38, 0
    %276 = vmatprep.subr.mxu0 0.0
    %277 = vmatpush1.msra.mxu0 %v36
    %278 = vmatprep.subr.mxu0 0.0
    %279 = vmatpush1.msra.mxu0 %v37
    %280 = vmatprep.subr.mxu0 0.0
    %281 = vmatpush1.msra.mxu0 %v274
    %282 = vmatprep.subr.mxu0 0.0
    %283 = vmatpush1.msra.mxu0 0.0
    %284 = vmatprep.subr.mxu0 0.0
    %285 = vmatpush1.msra.mxu0 0.0
    %286 = vmatprep.subr.mxu0 0.0
    %287 = vmatpush1.msra.mxu0 0.0
    %288 = vmatprep.subr.mxu0 0.0
    %289 = vmatpush1.msra.mxu0 0.0
    %290 = vmatprep.subr.mxu0 0.0
    %291 = vmatpush1.msra.mxu0 0.0
    %292 = vmatprep.subr.mxu0 0.0
    %293 = vmatpush1.msra.mxu0 0.0
    %294 = vmatprep.subr.mxu0 0.0
    %295 = vmatpush1.msra.mxu0 0.0
    %296 = vmatprep.subr.mxu0 0.0
    %297 = vmatpush1.msra.mxu0 0.0
    %298 = vmatprep.subr.mxu0 0.0
    %299 = vmatpush1.msra.mxu0 0.0
    %300 = vmatprep.subr.mxu0 0.0
    %301 = vmatpush1.msra.mxu0 0.0
    %302 = vmatprep.subr.mxu0 0.0
    %303 = vmatpush1.msra.mxu0 0.0
    %304 = vmatprep.subr.mxu0 0.0
    %305 = vmatpush1.msra.mxu0 0.0
    %306 = vmatprep.subr.mxu0 0.0
    %307 = vmatpush1.msra.mxu0 0.0
    %308 = vmatprep.subr.mxu0 0.0
    %309 = vmatpush1.msra.mxu0 0.0
    %310 = vmatprep.subr.mxu0 0.0
    %311 = vmatpush1.msra.mxu0 0.0
    %312 = vmatprep.subr.mxu0 0.0
    %313 = vmatpush1.msra.mxu0 0.0
    %314 = vmatprep.subr.mxu0 0.0
    %315 = vmatpush1.msra.mxu0 0.0
    %316 = vmatprep.subr.mxu0 0.0
    %317 = vmatpush1.msra.mxu0 0.0
    %318 = vmatprep.subr.mxu0 0.0
    %319 = vmatpush1.msra.mxu0 0.0
    %320 = vmatprep.subr.mxu0 0.0
    %321 = vmatpush1.msra.mxu0 0.0
    %322 = vmatprep.subr.mxu0 0.0
    %323 = vmatpush1.msra.mxu0 0.0
    %324 = vmatprep.subr.mxu0 0.0
    %325 = vmatpush1.msra.mxu0 0.0
    %326 = vmatprep.subr.mxu0 0.0
    %327 = vmatpush1.msra.mxu0 0.0
    %328 = vmatprep.subr.mxu0 0.0
    %329 = vmatpush1.msra.mxu0 0.0
    %330 = vmatprep.subr.mxu0 0.0
    %331 = vmatpush1.msra.mxu0 0.0
    %332 = vmatprep.subr.mxu0 0.0
    %333 = vmatpush1.msra.mxu0 0.0
    %334 = vmatprep.subr.mxu0 0.0
    %335 = vmatpush1.msra.mxu0 0.0
    %336 = vmatprep.subr.mxu0 0.0
    %337 = vmatpush1.msra.mxu0 0.0
    %338 = vmatprep.subr.mxu0 0.0
    %339 = vmatpush1.msra.mxu0 0.0
    %340 = vmatprep.mubr.f32.mxu0 0.0
    %341 = vmatmul.mubr.f32.gmra.mrb[0].mxu0 %v268
    %v342 = vpop.f32.mrb[0].mxu0
    %v343 = vadd.f32 0.0, %v342
    %v344 = vpop.f32.mrb[0].mxu0
    %345 = vmatprep.mubr.f32.mxu0 0.0
    %346 = vmatmul.mubr.f32.gmra.mrb[0].mxu0 %v271
    %v347 = vpop.f32.mrb[0].mxu0
    %v348 = vadd.f32 0.0, %v347
    %v349 = vpop.f32.mrb[0].mxu0
    %350 = vdwg.mxu0
    %v351 = vxor.u32 %v343, 2147483648
    %v352 = vxor.u32 %v348, 2147483648
    %v353 = vmul.f32 %v351, 1.442695
    %v354 = vpow.pop %v353
    %v355 = vmul.f32 %v352, 1.442695
    %v356 = vpow.pop %v355
    %v357 = vadd.f32 %v354, 1.0
    %v358 = vadd.f32 %v356, 1.0
    %v359 = vrcp.pop %v357
    %v360 = vmul.f32 1.0, %v359
    %v361 = vrcp.pop %v358
    %v362 = vmul.f32 1.0, %v361
    %v363 = vsel %vm55, %v360, 1.0
    %v364 = vsel %vm55, %v362, 1.0
    %v366 = vsel %vm266, %v363, 0
    %v369 = vsel %vm266, %v364, 0
    %v372 = vsel %vm121, %v41, 0
    %374 = vmatprep.subr.mxu0 0.0
    %375 = vmatpush1.msra.mxu0 %v39
    %376 = vmatprep.subr.mxu0 0.0
    %377 = vmatpush1.msra.mxu0 %v40
    %378 = vmatprep.subr.mxu0 0.0
    %379 = vmatpush1.msra.mxu0 %v372
    %380 = vmatprep.subr.mxu0 0.0
    %381 = vmatpush1.msra.mxu0 0.0
    %382 = vmatprep.subr.mxu0 0.0
    %383 = vmatpush1.msra.mxu0 0.0
    %384 = vmatprep.subr.mxu0 0.0
    %385 = vmatpush1.msra.mxu0 0.0
    %386 = vmatprep.subr.mxu0 0.0
    %387 = vmatpush1.msra.mxu0 0.0
    %388 = vmatprep.subr.mxu0 0.0
    %389 = vmatpush1.msra.mxu0 0.0
    %390 = vmatprep.subr.mxu0 0.0
    %391 = vmatpush1.msra.mxu0 0.0
    %392 = vmatprep.subr.mxu0 0.0
    %393 = vmatpush1.msra.mxu0 0.0
    %394 = vmatprep.subr.mxu0 0.0
    %395 = vmatpush1.msra.mxu0 0.0
    %396 = vmatprep.subr.mxu0 0.0
    %397 = vmatpush1.msra.mxu0 0.0
    %398 = vmatprep.subr.mxu0 0.0
    %399 = vmatpush1.msra.mxu0 0.0
    %400 = vmatprep.subr.mxu0 0.0
    %401 = vmatpush1.msra.mxu0 0.0
    %402 = vmatprep.subr.mxu0 0.0
    %403 = vmatpush1.msra.mxu0 0.0
    %404 = vmatprep.subr.mxu0 0.0
    %405 = vmatpush1.msra.mxu0 0.0
    %406 = vmatprep.subr.mxu0 0.0
    %407 = vmatpush1.msra.mxu0 0.0
    %408 = vmatprep.subr.mxu0 0.0
    %409 = vmatpush1.msra.mxu0 0.0
    %410 = vmatprep.subr.mxu0 0.0
    %411 = vmatpush1.msra.mxu0 0.0
    %412 = vmatprep.subr.mxu0 0.0
    %413 = vmatpush1.msra.mxu0 0.0
    %414 = vmatprep.subr.mxu0 0.0
    %415 = vmatpush1.msra.mxu0 0.0
    %416 = vmatprep.subr.mxu0 0.0
    %417 = vmatpush1.msra.mxu0 0.0
    %418 = vmatprep.subr.mxu0 0.0
    %419 = vmatpush1.msra.mxu0 0.0
    %420 = vmatprep.subr.mxu0 0.0
    %421 = vmatpush1.msra.mxu0 0.0
    %422 = vmatprep.subr.mxu0 0.0
    %423 = vmatpush1.msra.mxu0 0.0
    %424 = vmatprep.subr.mxu0 0.0
    %425 = vmatpush1.msra.mxu0 0.0
    %426 = vmatprep.subr.mxu0 0.0
    %427 = vmatpush1.msra.mxu0 0.0
    %428 = vmatprep.subr.mxu0 0.0
    %429 = vmatpush1.msra.mxu0 0.0
    %430 = vmatprep.subr.mxu0 0.0
    %431 = vmatpush1.msra.mxu0 0.0
    %432 = vmatprep.subr.mxu0 0.0
    %433 = vmatpush1.msra.mxu0 0.0
    %434 = vmatprep.subr.mxu0 0.0
    %435 = vmatpush1.msra.mxu0 0.0
    %436 = vmatprep.subr.mxu0 0.0
    %437 = vmatpush1.msra.mxu0 0.0
    %438 = vmatprep.mubr.f32.mxu0 0.0
    %439 = vmatmul.mubr.f32.gmra.mrb[0].mxu0 %v366
    %v440 = vpop.f32.mrb[0].mxu0
    %v441 = vadd.f32 0.0, %v440
    %v442 = vpop.f32.mrb[0].mxu0
    %443 = vmatprep.mubr.f32.mxu0 0.0
    %444 = vmatmul.mubr.f32.gmra.mrb[0].mxu0 %v369
    %v445 = vpop.f32.mrb[0].mxu0
    %v446 = vadd.f32 0.0, %v445
    %v447 = vpop.f32.mrb[0].mxu0
    %448 = vdwg.mxu0
    %v449 = vpack.c.bf16 %v446, %v441
    %452 = vrot.lane.b32.xlu0 %v441, 120
    %v453 = vpop.permute.xlu0 %452
    %454 = vrot.lane.b32.xlu0 %v446, 120
    %v455 = vpop.permute.xlu0 %454
    %458 = vmatprep.subr.bf16.mxu0 0
    %459 = vmatpush1.bf16.msra.mxu0 %v449
    %460 = vmatprep.subr.bf16.mxu0 0
    %461 = vmatpush1.bf16.msra.mxu0 0
    %462 = vmatprep.subr.bf16.mxu0 0
    %463 = vmatpush1.bf16.msra.mxu0 0
    %464 = vmatprep.subr.bf16.mxu0 0
    %465 = vmatpush1.bf16.msra.mxu0 0
    %466 = vmatprep.subr.bf16.mxu0 0
    %467 = vmatpush1.bf16.msra.mxu0 0
    %468 = vmatprep.subr.bf16.mxu0 0
    %469 = vmatpush1.bf16.msra.mxu0 0
    %470 = vmatprep.subr.bf16.mxu0 0
    %471 = vmatpush1.bf16.msra.mxu0 0
    %472 = vmatprep.subr.bf16.mxu0 0
    %473 = vmatpush1.bf16.msra.mxu0 0
    %474 = vmatprep.subr.bf16.mxu0 0
    %475 = vmatpush1.bf16.msra.mxu0 0
    %476 = vmatprep.subr.bf16.mxu0 0
    %477 = vmatpush1.bf16.msra.mxu0 0
    %478 = vmatprep.subr.bf16.mxu0 0
    %479 = vmatpush1.bf16.msra.mxu0 0
    %480 = vmatprep.subr.bf16.mxu0 0
    %481 = vmatpush1.bf16.msra.mxu0 0
    %482 = vmatprep.subr.bf16.mxu0 0
    %483 = vmatpush1.bf16.msra.mxu0 0
    %484 = vmatprep.subr.bf16.mxu0 0
    %485 = vmatpush1.bf16.msra.mxu0 0
    %486 = vmatprep.subr.bf16.mxu0 0
    %487 = vmatpush1.bf16.msra.mxu0 0
    %488 = vmatprep.subr.bf16.mxu0 0
    %489 = vmatpush1.bf16.msra.mxu0 0
    %490 = vmatprep.mubr.bf16.mxu0 0
    %491 = vmatmul.mubr.bf16.gmra.mrb[0].mxu0 %v57
    %v492 = vpop.f32.mrb[0].mxu0
    %v493 = vadd.f32 %v453, %v492
    %v494 = vpop.f32.mrb[0].mxu0
    %v495 = vpop.f32.mrb[0].mxu0
    %v496 = vadd.f32 %v455, %v495
    %v497 = vpop.f32.mrb[0].mxu0
    %498 = vdwg.mxu0
    %v499 = vxor.u32 %v493, 2147483648
    %v500 = vxor.u32 %v496, 2147483648
    %v501 = vmul.f32 %v499, 1.442695
    %v502 = vpow.pop %v501
    %v503 = vmul.f32 %v500, 1.442695
    %v504 = vpow.pop %v503
    %v505 = vadd.f32 %v502, 1.0
    %v506 = vadd.f32 %v504, 1.0
    %v507 = vrcp.pop %v505
    %v508 = vmul.f32 1.0, %v507
    %v509 = vrcp.pop %v506
    %v510 = vmul.f32 1.0, %v509
    %v511 = vsel %vm111, %v508, 1.0
    %v512 = vsel %vm111, %v510, 1.0
    %v514 = vsel %vm114, %v511, 0
    %v517 = vsel %vm114, %v512, 0
    %v520 = vsel %vm121, %v43, 0
    %522 = vmatprep.subr.mxu0 0.0
    %523 = vmatpush1.msra.mxu0 %v42
    %524 = vmatprep.subr.mxu0 0.0
    %525 = vmatpush1.msra.mxu0 %v520
    %526 = vmatprep.subr.mxu0 0.0
    %527 = vmatpush1.msra.mxu0 0.0
    %528 = vmatprep.subr.mxu0 0.0
    %529 = vmatpush1.msra.mxu0 0.0
    %530 = vmatprep.subr.mxu0 0.0
    %531 = vmatpush1.msra.mxu0 0.0
    %532 = vmatprep.subr.mxu0 0.0
    %533 = vmatpush1.msra.mxu0 0.0
    %534 = vmatprep.subr.mxu0 0.0
    %535 = vmatpush1.msra.mxu0 0.0
    %536 = vmatprep.subr.mxu0 0.0
    %537 = vmatpush1.msra.mxu0 0.0
    %538 = vmatprep.subr.mxu0 0.0
    %539 = vmatpush1.msra.mxu0 0.0
    %540 = vmatprep.subr.mxu0 0.0
    %541 = vmatpush1.msra.mxu0 0.0
    %542 = vmatprep.subr.mxu0 0.0
    %543 = vmatpush1.msra.mxu0 0.0
    %544 = vmatprep.subr.mxu0 0.0
    %545 = vmatpush1.msra.mxu0 0.0
    %546 = vmatprep.subr.mxu0 0.0
    %547 = vmatpush1.msra.mxu0 0.0
    %548 = vmatprep.subr.mxu0 0.0
    %549 = vmatpush1.msra.mxu0 0.0
    %550 = vmatprep.subr.mxu0 0.0
    %551 = vmatpush1.msra.mxu0 0.0
    %552 = vmatprep.subr.mxu0 0.0
    %553 = vmatpush1.msra.mxu0 0.0
    %554 = vmatprep.subr.mxu0 0.0
    %555 = vmatpush1.msra.mxu0 0.0
    %556 = vmatprep.subr.mxu0 0.0
    %557 = vmatpush1.msra.mxu0 0.0
    %558 = vmatprep.subr.mxu0 0.0
    %559 = vmatpush1.msra.mxu0 0.0
    %560 = vmatprep.subr.mxu0 0.0
    %561 = vmatpush1.msra.mxu0 0.0
    %562 = vmatprep.subr.mxu0 0.0
    %563 = vmatpush1.msra.mxu0 0.0
    %564 = vmatprep.subr.mxu0 0.0
    %565 = vmatpush1.msra.mxu0 0.0
    %566 = vmatprep.subr.mxu0 0.0
    %567 = vmatpush1.msra.mxu0 0.0
    %568 = vmatprep.subr.mxu0 0.0
    %569 = vmatpush1.msra.mxu0 0.0
    %570 = vmatprep.subr.mxu0 0.0
    %571 = vmatpush1.msra.mxu0 0.0
    %572 = vmatprep.subr.mxu0 0.0
    %573 = vmatpush1.msra.mxu0 0.0
    %574 = vmatprep.subr.mxu0 0.0
    %575 = vmatpush1.msra.mxu0 0.0
    %576 = vmatprep.subr.mxu0 0.0
    %577 = vmatpush1.msra.mxu0 0.0
    %578 = vmatprep.subr.mxu0 0.0
    %579 = vmatpush1.msra.mxu0 0.0
    %580 = vmatprep.subr.mxu0 0.0
    %581 = vmatpush1.msra.mxu0 0.0
    %582 = vmatprep.subr.mxu0 0.0
    %583 = vmatpush1.msra.mxu0 0.0
    %584 = vmatprep.subr.mxu0 0.0
    %585 = vmatpush1.msra.mxu0 0.0
    %586 = vmatprep.mubr.f32.mxu0 0.0
    %587 = vmatmul.mubr.f32.gmra.mrb[0].mxu0 %v514
    %v588 = vpop.f32.mrb[0].mxu0
    %v589 = vadd.f32 0.0, %v588
    %v590 = vpop.f32.mrb[0].mxu0
    %591 = vmatprep.mubr.f32.mxu0 0.0
    %592 = vmatmul.mubr.f32.gmra.mrb[0].mxu0 %v517
    %v593 = vpop.f32.mrb[0].mxu0
    %v594 = vadd.f32 0.0, %v593
    %v595 = vpop.f32.mrb[0].mxu0
    %596 = vdwg.mxu0
    %v597 = vxor.u32 %v589, 2147483648
    %v598 = vxor.u32 %v594, 2147483648
    %v599 = vmul.f32 %v597, 1.442695
    %v600 = vpow.pop %v599
    %v601 = vmul.f32 %v598, 1.442695
    %v602 = vpow.pop %v601
    %v603 = vadd.f32 %v600, 1.0
    %v604 = vadd.f32 %v602, 1.0
    %v605 = vrcp.pop %v603
    %v606 = vmul.f32 1.0, %v605
    %v607 = vrcp.pop %v604
    %v608 = vmul.f32 1.0, %v607
    %vm609 = vcmask 261120
    %v610 = vsel %vm609, %v606, 1.0
    %v611 = vsel %vm609, %v608, 1.0
    %vm612 = vcmask 269312
    %v614 = vsel %vm612, %v610, 0
    %v617 = vsel %vm612, %v611, 0
    %v620 = vsel %vm121, %v48, 0
    %622 = vmatprep.subr.mxu0 0.0
    %623 = vmatpush1.msra.mxu0 %v44
    %624 = vmatprep.subr.mxu0 0.0
    %625 = vmatpush1.msra.mxu0 %v45
    %626 = vmatprep.subr.mxu0 0.0
    %627 = vmatpush1.msra.mxu0 %v46
    %628 = vmatprep.subr.mxu0 0.0
    %629 = vmatpush1.msra.mxu0 %v47
    %630 = vmatprep.subr.mxu0 0.0
    %631 = vmatpush1.msra.mxu0 %v620
    %632 = vmatprep.subr.mxu0 0.0
    %633 = vmatpush1.msra.mxu0 0.0
    %634 = vmatprep.subr.mxu0 0.0
    %635 = vmatpush1.msra.mxu0 0.0
    %636 = vmatprep.subr.mxu0 0.0
    %637 = vmatpush1.msra.mxu0 0.0
    %638 = vmatprep.subr.mxu0 0.0
    %639 = vmatpush1.msra.mxu0 0.0
    %640 = vmatprep.subr.mxu0 0.0
    %641 = vmatpush1.msra.mxu0 0.0
    %642 = vmatprep.subr.mxu0 0.0
    %643 = vmatpush1.msra.mxu0 0.0
    %644 = vmatprep.subr.mxu0 0.0
    %645 = vmatpush1.msra.mxu0 0.0
    %646 = vmatprep.subr.mxu0 0.0
    %647 = vmatpush1.msra.mxu0 0.0
    %648 = vmatprep.subr.mxu0 0.0
    %649 = vmatpush1.msra.mxu0 0.0
    %650 = vmatprep.subr.mxu0 0.0
    %651 = vmatpush1.msra.mxu0 0.0
    %652 = vmatprep.subr.mxu0 0.0
    %653 = vmatpush1.msra.mxu0 0.0
    %654 = vmatprep.subr.mxu0 0.0
    %655 = vmatpush1.msra.mxu0 0.0
    %656 = vmatprep.subr.mxu0 0.0
    %657 = vmatpush1.msra.mxu0 0.0
    %658 = vmatprep.subr.mxu0 0.0
    %659 = vmatpush1.msra.mxu0 0.0
    %660 = vmatprep.subr.mxu0 0.0
    %661 = vmatpush1.msra.mxu0 0.0
    %662 = vmatprep.subr.mxu0 0.0
    %663 = vmatpush1.msra.mxu0 0.0
    %664 = vmatprep.subr.mxu0 0.0
    %665 = vmatpush1.msra.mxu0 0.0
    %666 = vmatprep.subr.mxu0 0.0
    %667 = vmatpush1.msra.mxu0 0.0
    %668 = vmatprep.subr.mxu0 0.0
    %669 = vmatpush1.msra.mxu0 0.0
    %670 = vmatprep.subr.mxu0 0.0
    %671 = vmatpush1.msra.mxu0 0.0
    %672 = vmatprep.subr.mxu0 0.0
    %673 = vmatpush1.msra.mxu0 0.0
    %674 = vmatprep.subr.mxu0 0.0
    %675 = vmatpush1.msra.mxu0 0.0
    %676 = vmatprep.subr.mxu0 0.0
    %677 = vmatpush1.msra.mxu0 0.0
    %678 = vmatprep.subr.mxu0 0.0
    %679 = vmatpush1.msra.mxu0 0.0
    %680 = vmatprep.subr.mxu0 0.0
    %681 = vmatpush1.msra.mxu0 0.0
    %682 = vmatprep.subr.mxu0 0.0
    %683 = vmatpush1.msra.mxu0 0.0
    %684 = vmatprep.subr.mxu0 0.0
    %685 = vmatpush1.msra.mxu0 0.0
    %686 = vmatprep.mubr.f32.mxu0 0.0
    %687 = vmatmul.mubr.f32.gmra.mrb[0].mxu0 %v614
    %v688 = vpop.f32.mrb[0].mxu0
    %v689 = vadd.f32 0.0, %v688
    %v690 = vpop.f32.mrb[0].mxu0
    %691 = vmatprep.mubr.f32.mxu0 0.0
    %692 = vmatmul.mubr.f32.gmra.mrb[0].mxu0 %v617
    %v693 = vpop.f32.mrb[0].mxu0
    %v694 = vadd.f32 0.0, %v693
    %v695 = vpop.f32.mrb[0].mxu0
    %696 = vdwg.mxu0
    %697 = vst [vmem:[#allocation5] sm:$0xff] %v689
    %698 = vst [vmem:[#allocation5 + $0x8] sm:$0xff] %v694
    // Predicated region
    $region18: #{tpu_custom_call.1} parent=1 // pred_check
      _
    $region19: #{tpu_custom_call.1} parent=1 // pred_check_branch
      %700 = sbr.rel (0) target = $region21
    $region20: #{tpu_custom_call.1} parent=1 // pred_region
      %s702 = ssub.s32 256, 256
      %703 = vsyncadd [#allocation4], %s702
      %s704 = sshll.u32 [#allocation5], 4
      %s705 = int_to_ptr.vmem [resolvable:$true] %s704
      %710 = dma.vmem_to_hbm [thread:$0]  %s705, 256, %s3, [#allocation4], 128, 128, 8
    $region21: #{tpu_custom_call.1} parent=1 // pred_fallthru
      _
    // Predicated region
    $region22: #{tpu_custom_call.1} parent=1 // pred_check
      _
    $region23: #{tpu_custom_call.1} parent=1 // pred_check_branch
      %712 = sbr.rel (0) target = $region25
    $region24: #{tpu_custom_call.1} parent=1 // pred_region
      %713 = dma.done [#allocation4], 256
    $region25: #{tpu_custom_call.1} parent=1 // pred_fallthru
      _
    %714 = vsyncpa [#allocation3], 1
    %715 = vsyncpa [#allocation4], 1

</llo_original>
